<compile_context>
chip_gen: v5e
topology: v5e:2x2
jax: 0.10.0
libtpu: 0.0.40
codegen_flags: <defaults>
</compile_context>

<pallas_src>
import functools

import jax
import jax.numpy as jnp
from jax.experimental import pallas as pl
from jax.experimental.pallas import tpu as pltpu

LANE = 128           # vreg lane width
SUBLANE = 8          # vreg sublane count
MAX_ROW_TILE = 4096  # packed rows per grid step (~1 MiB bf16): amortizes per-step
                     # overhead on v5e/v6e and keeps the v7x DMA engine busy while
                     # staying tiny vs. every generation's VMEM budget.


# ---------------------------------------------------------------------------
# Fused kernel: stream lane-packed node rows -> per-type f32 sums (VPU only),
# finalize once: per-type adapt_ws dot + mean + 2-layer readout MLP (MXU).
# ---------------------------------------------------------------------------
def _fused_hmg_kernel(tile_type_ref, x_ref, w_ref, btot_ref,
                      w1_ref, b1_ref, w2_ref, b2_ref,
                      o_ref, acc_ref, *, inv_n_total, tile_rows, n_types):
    i = pl.program_id(0)

    @pl.when(i == 0)
    def _init():
        acc_ref[...] = jnp.zeros_like(acc_ref)

    # Node type of this (type-homogeneous) tile, from SMEM scalar prefetch.
    t = tile_type_ref[i]

    # Stream one packed row tile: bf16 in HBM/VMEM, f32 math on the VPU.
    # Group-of-8 partial sum = pure VALU vreg adds; no per-tile MXU or XLU work.
    x = x_ref[...].astype(jnp.float32)                                   # (tile_rows, 128)
    part8 = jnp.sum(x.reshape(tile_rows // SUBLANE, SUBLANE, LANE), axis=0)  # (8, 128)

    acc_ref[t] = acc_ref[t] + part8                                      # per-type f32 acc

    @pl.when(i == pl.num_programs(0) - 1)
    def _finalize():
        # Single cross-sublane collapse + one adapt_ws matmul PER TYPE, once per kernel.
        pooled = btot_ref[...]                                           # sum_t N_t * b_t
        for tt in range(n_types):                                        # static unroll
            lane_sum = jnp.sum(acc_ref[tt], axis=0, keepdims=True)       # (1, 128)
            pooled = pooled + jnp.dot(lane_sum, w_ref[tt],
                                      preferred_element_type=jnp.float32)
        pooled = pooled * inv_n_total                                    # graph mean pool
        z = jnp.dot(pooled, w1_ref[...], preferred_element_type=jnp.float32) + b1_ref[...]
        z = jnp.maximum(z, 0.0)
        o_ref[...] = (jnp.dot(z, w2_ref[...], preferred_element_type=jnp.float32)
                      + b2_ref[...])                                     # lane-dense (1,128)


def _round_up(x, m):
    return ((x + m - 1) // m) * m


def _ceil_div(a, b):
    return -(-a // b)


# ---------------------------------------------------------------------------
# One-time graph/parameter packing (graph-build time, NOT per forward call).
# ---------------------------------------------------------------------------
def pack_graph(node_feats, params, *, hidden_feats, out_feats,
               max_row_tile=MAX_ROW_TILE):
    """Lane-pack node features, build replicated adapt_ws weights and the
    ragged per-type tile schedule consumed by the kernel."""
    ntypes = sorted(node_feats.keys())
    n_types = len(ntypes)
    assert 1 <= hidden_feats <= LANE, "hidden_feats must be <= 128"
    assert 1 <= out_feats <= LANE, "out_feats must be <= 128"

    dims = {nt: int(node_feats[nt].shape[1]) for nt in ntypes}
    for nt in ntypes:
        assert 1 <= dims[nt] <= LANE, f"in_dim for {nt} must be <= 128"
    packs = {nt: LANE // dims[nt] for nt in ntypes}            # nodes per 128-lane row
    counts = {nt: int(node_feats[nt].shape[0]) for nt in ntypes}
    rows = {nt: _ceil_div(counts[nt], packs[nt]) for nt in ntypes}
    n_total = sum(counts.values())

    tile_rows = min(max_row_tile, _round_up(max(max(rows.values()), 1), SUBLANE))
    tiles = {nt: max(1, _ceil_div(rows[nt], tile_rows)) for nt in ntypes}
    total_rows = sum(tiles.values()) * tile_rows

    x_packed = jnp.zeros((total_rows, LANE), jnp.bfloat16)
    w_stack = jnp.zeros((n_types, LANE, LANE), jnp.float32)    # replicated per pack slot
    bias_total = jnp.zeros((1, LANE), jnp.float32)             # sum_t N_t * b_t (exact)
    tile_type = []
    row_off = 0
    for ti, nt in enumerate(ntypes):
        d, p, n_t, r_t = dims[nt], packs[nt], counts[nt], rows[nt]
        w, b = params["adapt_ws"][nt]                          # (d, H), (1, H)
        if n_t > 0:
            x = node_feats[nt].astype(jnp.bfloat16)
            x = jnp.pad(x, ((0, r_t * p - n_t), (0, 0))).reshape(r_t, p * d)
            x_packed = x_packed.at[row_off:row_off + r_t, :p * d].set(x)
            bias_total = bias_total.at[:, :hidden_feats].add(float(n_t) * b)
        w_stack = w_stack.at[ti, :p * d, :hidden_feats].set(jnp.tile(w, (p, 1)))
        tile_type.extend([ti] * tiles[nt])
        row_off += tiles[nt] * tile_rows

    w1, b1 = params["readout"]["fc1"]
    w2, b2 = params["readout"]["fc2"]
    w1p = jnp.zeros((LANE, LANE), jnp.float32).at[:hidden_feats, :hidden_feats].set(w1)
    b1p = jnp.zeros((1, LANE), jnp.float32).at[:, :hidden_feats].set(b1)
    w2p = jnp.zeros((LANE, LANE), jnp.float32).at[:hidden_feats, :out_feats].set(w2)
    b2p = jnp.zeros((1, LANE), jnp.float32).at[:, :out_feats].set(b2)

    return dict(
        tile_type=jnp.asarray(tile_type, jnp.int32),
        x=x_packed, w=w_stack, btot=bias_total,
        w1=w1p, b1=b1p, w2=w2p, b2=b2p,
        tile_rows=tile_rows, n_types=n_types, n_total=n_total,
        out_feats=out_feats,
    )


# ---------------------------------------------------------------------------
# HMGEncoder forward (single graph, is_batch=False) — one pallas_call.
# ---------------------------------------------------------------------------
def hmg_encoder_forward(packed):
    tile_rows = packed["tile_rows"]
    n_types = packed["n_types"]
    n_tiles = packed["x"].shape[0] // tile_rows

    kernel = functools.partial(
        _fused_hmg_kernel,
        inv_n_total=1.0 / float(packed["n_total"]),
        tile_rows=tile_rows, n_types=n_types)

    out_padded = pl.pallas_call(
        kernel,
        out_shape=jax.ShapeDtypeStruct((1, LANE), jnp.float32),
        grid_spec=pltpu.PrefetchScalarGridSpec(
            num_scalar_prefetch=1,                       # tile -> node-type id (SMEM)
            grid=(n_tiles,),
            in_specs=[
                pl.BlockSpec((tile_rows, LANE), lambda i, tt: (i, 0)),      # packed rows
                pl.BlockSpec((n_types, LANE, LANE), lambda i, tt: (0, 0, 0)),  # adapt_ws
                pl.BlockSpec((1, LANE), lambda i, tt: (0, 0)),              # sum_t N_t*b_t
                pl.BlockSpec((LANE, LANE), lambda i, tt: (0, 0)),           # readout W1
                pl.BlockSpec((1, LANE), lambda i, tt: (0, 0)),              # readout b1
                pl.BlockSpec((LANE, LANE), lambda i, tt: (0, 0)),           # readout W2
                pl.BlockSpec((1, LANE), lambda i, tt: (0, 0)),              # readout b2
            ],
            out_specs=pl.BlockSpec((1, LANE), lambda i, tt: (0, 0)),
            scratch_shapes=[pltpu.VMEM((n_types, SUBLANE, LANE), jnp.float32)],
        ),
        # Single reduction axis feeding a shared accumulator -> "arbitrary".
        # VMEM: 2 x ~1 MiB bf16 x-buffers + <0.5 MiB of constants; fits every gen.
        compiler_params=pltpu.CompilerParams(
            dimension_semantics=("arbitrary",)),
    )(packed["tile_type"], packed["x"], packed["w"], packed["btot"],
      packed["w1"], packed["b1"], packed["w2"], packed["b2"])

    return out_padded[:, :packed["out_feats"]]


# ---------------------------------------------------------------------------
# Deterministic parameter init (synthetic; shapes implied by __init__)
# ---------------------------------------------------------------------------
def init_params(key, in_dims, hidden_feats, out_feats):
    params = {"adapt_ws": {}, "readout": {}}
    for ntype in sorted(in_dims.keys()):
        key, kw, kb = jax.random.split(key, 3)
        d = in_dims[ntype]
        params["adapt_ws"][ntype] = (
            jax.random.normal(kw, (d, hidden_feats), jnp.float32) * 0.1,
            jax.random.normal(kb, (1, hidden_feats), jnp.float32) * 0.1,
        )
    key, k1, k2, k3, k4 = jax.random.split(key, 5)
    params["readout"]["fc1"] = (
        jax.random.normal(k1, (hidden_feats, hidden_feats), jnp.float32) * 0.1,
        jax.random.normal(k2, (1, hidden_feats), jnp.float32) * 0.1,
    )
    params["readout"]["fc2"] = (
        jax.random.normal(k3, (hidden_feats, out_feats), jnp.float32) * 0.1,
        jax.random.normal(k4, (1, out_feats), jnp.float32) * 0.1,
    )
    return params


def _reference_forward(node_feats, params):
    """Pure-JAX reference: project -> concat -> mean pool -> MLP."""
    projected = []
    for ntype in sorted(node_feats.keys()):
        # match the kernel's bf16 feature storage for an apples-to-apples check
        x = node_feats[ntype].astype(jnp.bfloat16).astype(jnp.float32)
        w, b = params["adapt_ws"][ntype]
        projected.append(x @ w + b)
    h = jnp.concatenate(projected, axis=0)
    pooled = jnp.mean(h, axis=0, keepdims=True)
    w1, b1 = params["readout"]["fc1"]
    w2, b2 = params["readout"]["fc2"]
    return jnp.maximum(pooled @ w1 + b1, 0.0) @ w2 + b2


if __name__ == "__main__":
    key = jax.random.PRNGKey(0)

    # Small heterogeneous "molecular graph": two node types with small feature dims
    # (exercises lane-packing of 16 and 8 nodes per 128-lane row, partial last rows,
    # and ragged per-type tiles).
    in_dims = {"atom": 8, "frag": 16}
    num_nodes = {"atom": 40, "frag": 12}
    hidden_feats = 32
    out_feats = 8
    # n_heads / n_layers belong to the (undefined) HGTLayer; see TODO above.

    key, ka, kf = jax.random.split(key, 3)
    node_feats = {
        "atom": jax.random.normal(ka, (num_nodes["atom"], in_dims["atom"]), jnp.float32),
        "frag": jax.random.normal(kf, (num_nodes["frag"], in_dims["frag"]), jnp.float32),
    }
    params = init_params(key, in_dims, hidden_feats, out_feats)

    # One-time packing (graph-build time), then the single fused kernel call.
    packed = pack_graph(node_feats, params,
                        hidden_feats=hidden_feats, out_feats=out_feats)
    out = hmg_encoder_forward(packed)
    out = jax.block_until_ready(out)

    ref = _reference_forward(node_feats, params)
    assert out.shape == (1, out_feats)
    assert bool(jnp.all(jnp.isfinite(out)))
    assert bool(jnp.allclose(out, ref, rtol=2e-2, atol=2e-2)), (out, ref)
    print("KERNEL_OK")
</pallas_src>

<mosaic_0001>
module attributes {stable_mosaic.version = 11 : i64} {
  func.func @_fused_hmg_kernel(%arg0: i32, %arg1: memref<2xi32, #tpu.memory_space<smem>>, %arg2: memref<8x128xbf16, #tpu.memory_space<vmem>>, %arg3: memref<2x128x128xf32, #tpu.memory_space<vmem>>, %arg4: memref<1x128xf32, #tpu.memory_space<vmem>>, %arg5: memref<128x128xf32, #tpu.memory_space<vmem>>, %arg6: memref<1x128xf32, #tpu.memory_space<vmem>>, %arg7: memref<128x128xf32, #tpu.memory_space<vmem>>, %arg8: memref<1x128xf32, #tpu.memory_space<vmem>>, %arg9: memref<1x128xf32, #tpu.memory_space<vmem>>, %arg10: memref<2x8x128xf32, #tpu.memory_space<vmem>>) attributes {dimension_semantics = [#tpu.dimension_semantics<arbitrary>], iteration_bounds = array<i64: 2>, scalar_prefetch = 1 : i64, scratch_operands = 1 : i64, tpu.core_type = #tpu.core_type<tc>, window_params = [{transform_indices = @transform_0, window_bounds = array<i64: 8, 128>}, {pipeline_mode = #tpu.pipeline_mode<synchronous>, transform_indices = @transform_1, window_bounds = array<i64: 2, 128, 128>}, {pipeline_mode = #tpu.pipeline_mode<synchronous>, transform_indices = @transform_2, window_bounds = array<i64: 1, 128>}, {pipeline_mode = #tpu.pipeline_mode<synchronous>, transform_indices = @transform_3, window_bounds = array<i64: 128, 128>}, {pipeline_mode = #tpu.pipeline_mode<synchronous>, transform_indices = @transform_4, window_bounds = array<i64: 1, 128>}, {pipeline_mode = #tpu.pipeline_mode<synchronous>, transform_indices = @transform_5, window_bounds = array<i64: 128, 128>}, {pipeline_mode = #tpu.pipeline_mode<synchronous>, transform_indices = @transform_6, window_bounds = array<i64: 1, 128>}, {pipeline_mode = #tpu.pipeline_mode<synchronous>, transform_indices = @transform_7, window_bounds = array<i64: 1, 128>}]} {
    %c0_i32 = arith.constant 0 : i32
    %0 = arith.cmpi eq, %arg0, %c0_i32 : i32
    %1 = arith.extui %0 : i1 to i32
    %c0_i32_0 = arith.constant 0 : i32
    %2 = arith.cmpi ne, %1, %c0_i32_0 : i32
    scf.if %2 {
      %cst_7 = arith.constant 0.000000e+00 : f32
      %20 = vector.broadcast %cst_7 : f32 to vector<2x8x128xf32>
      %c0_8 = arith.constant 0 : index
      %c0_9 = arith.constant 0 : index
      %c0_10 = arith.constant 0 : index
      %21 = vector.load %arg10[%c0_8, %c0_9, %c0_10] : memref<2x8x128xf32, #tpu.memory_space<vmem>>, vector<2x8x128xf32>
      tpu.vector_store %arg10[%c0_8, %c0_9, %c0_10], %20 {strides = array<i32>} : memref<2x8x128xf32, #tpu.memory_space<vmem>>, vector<2x8x128xf32>,
    } else {
    }
    %3 = arith.index_cast %arg0 : i32 to index
    %4 = memref.load %arg1[%3] : memref<2xi32, #tpu.memory_space<smem>>
    %c0 = arith.constant 0 : index
    %c0_1 = arith.constant 0 : index
    %5 = vector.load %arg2[%c0, %c0_1] : memref<8x128xbf16, #tpu.memory_space<vmem>>, vector<8x128xbf16>
    %6 = arith.extf %5 : vector<8x128xbf16> to vector<8x128xf32>
    %7 = vector.shape_cast %6 : vector<8x128xf32> to vector<1x8x128xf32>
    %cst = arith.constant dense<0.000000e+00> : vector<8x128xf32>
    %8 = vector.multi_reduction <add>, %7, %cst [0] : vector<1x8x128xf32> to vector<8x128xf32>
    %9 = arith.index_cast %4 : i32 to index
    %c0_2 = arith.constant 0 : index
    %c0_3 = arith.constant 0 : index
    %10 = vector.load %arg10[%9, %c0_2, %c0_3] : memref<2x8x128xf32, #tpu.memory_space<vmem>>, vector<1x8x128xf32>
    %11 = vector.shape_cast %10 : vector<1x8x128xf32> to vector<8x128xf32>
    %12 = arith.addf %11, %8 : vector<8x128xf32>
    %13 = arith.index_cast %4 : i32 to index
    %c0_4 = arith.constant 0 : index
    %c0_5 = arith.constant 0 : index
    %14 = vector.load %arg10[%13, %c0_4, %c0_5] : memref<2x8x128xf32, #tpu.memory_space<vmem>>, vector<1x8x128xf32>
    %15 = vector.shape_cast %14 : vector<1x8x128xf32> to vector<8x128xf32>
    %16 = vector.shape_cast %12 : vector<8x128xf32> to vector<1x8x128xf32>
    tpu.vector_store %arg10[%13, %c0_4, %c0_5], %16 {strides = array<i32>} : memref<2x8x128xf32, #tpu.memory_space<vmem>>, vector<1x8x128xf32>,
    %c1_i32 = arith.constant 1 : i32
    %17 = arith.cmpi eq, %arg0, %c1_i32 : i32
    %18 = arith.extui %17 : i1 to i32
    %c0_i32_6 = arith.constant 0 : i32
    %19 = arith.cmpi ne, %18, %c0_i32_6 : i32
    scf.if %19 {
      %c0_7 = arith.constant 0 : index
      %c0_8 = arith.constant 0 : index
      %20 = vector.load %arg4[%c0_7, %c0_8] : memref<1x128xf32, #tpu.memory_space<vmem>>, vector<1x128xf32>
      %c0_9 = arith.constant 0 : index
      %c0_10 = arith.constant 0 : index
      %c0_11 = arith.constant 0 : index
      %21 = vector.load %arg10[%c0_9, %c0_10, %c0_11] : memref<2x8x128xf32, #tpu.memory_space<vmem>>, vector<1x8x128xf32>
      %22 = vector.shape_cast %21 : vector<1x8x128xf32> to vector<8x128xf32>
      %cst_12 = arith.constant dense<0.000000e+00> : vector<128xf32>
      %23 = vector.multi_reduction <add>, %22, %cst_12 [0] : vector<8x128xf32> to vector<128xf32>
      %24 = vector.shape_cast %23 : vector<128xf32> to vector<1x128xf32>
      %c0_13 = arith.constant 0 : index
      %c0_14 = arith.constant 0 : index
      %c0_15 = arith.constant 0 : index
      %25 = vector.load %arg3[%c0_13, %c0_14, %c0_15] : memref<2x128x128xf32, #tpu.memory_space<vmem>>, vector<1x128x128xf32>
      %26 = vector.shape_cast %25 : vector<1x128x128xf32> to vector<128x128xf32>
      %cst_16 = arith.constant dense<0.000000e+00> : vector<1x128xf32>
      %27 = tpu.matmul %24, %26, %cst_16 {dimension_numbers = #tpu.dot_dimension_numbers<[1], [0], [0], [1], [0, 0, 1, 1], [], []>} : vector<1x128xf32>, vector<128x128xf32>, vector<1x128xf32> -> vector<1x128xf32>
      %28 = arith.addf %20, %27 : vector<1x128xf32>
      %c1 = arith.constant 1 : index
      %c0_17 = arith.constant 0 : index
      %c0_18 = arith.constant 0 : index
      %29 = vector.load %arg10[%c1, %c0_17, %c0_18] : memref<2x8x128xf32, #tpu.memory_space<vmem>>, vector<1x8x128xf32>
      %30 = vector.shape_cast %29 : vector<1x8x128xf32> to vector<8x128xf32>
      %cst_19 = arith.constant dense<0.000000e+00> : vector<128xf32>
      %31 = vector.multi_reduction <add>, %30, %cst_19 [0] : vector<8x128xf32> to vector<128xf32>
      %32 = vector.shape_cast %31 : vector<128xf32> to vector<1x128xf32>
      %c1_20 = arith.constant 1 : index
      %c0_21 = arith.constant 0 : index
      %c0_22 = arith.constant 0 : index
      %33 = vector.load %arg3[%c1_20, %c0_21, %c0_22] : memref<2x128x128xf32, #tpu.memory_space<vmem>>, vector<1x128x128xf32>
      %34 = vector.shape_cast %33 : vector<1x128x128xf32> to vector<128x128xf32>
      %cst_23 = arith.constant dense<0.000000e+00> : vector<1x128xf32>
      %35 = tpu.matmul %32, %34, %cst_23 {dimension_numbers = #tpu.dot_dimension_numbers<[1], [0], [0], [1], [0, 0, 1, 1], [], []>} : vector<1x128xf32>, vector<128x128xf32>, vector<1x128xf32> -> vector<1x128xf32>
      %36 = arith.addf %28, %35 : vector<1x128xf32>
      %cst_24 = arith.constant 0.0192307699 : f32
      %37 = vector.broadcast %cst_24 : f32 to vector<1x128xf32>
      %38 = arith.mulf %36, %37 : vector<1x128xf32>
      %c0_25 = arith.constant 0 : index
      %c0_26 = arith.constant 0 : index
      %39 = vector.load %arg5[%c0_25, %c0_26] : memref<128x128xf32, #tpu.memory_space<vmem>>, vector<128x128xf32>
      %cst_27 = arith.constant dense<0.000000e+00> : vector<1x128xf32>
      %40 = tpu.matmul %38, %39, %cst_27 {dimension_numbers = #tpu.dot_dimension_numbers<[1], [0], [0], [1], [0, 0, 1, 1], [], []>} : vector<1x128xf32>, vector<128x128xf32>, vector<1x128xf32> -> vector<1x128xf32>
      %c0_28 = arith.constant 0 : index
      %c0_29 = arith.constant 0 : index
      %41 = vector.load %arg6[%c0_28, %c0_29] : memref<1x128xf32, #tpu.memory_space<vmem>>, vector<1x128xf32>
      %42 = arith.addf %40, %41 : vector<1x128xf32>
      %cst_30 = arith.constant 0.000000e+00 : f32
      %43 = vector.broadcast %cst_30 : f32 to vector<1x128xf32>
      %44 = arith.maximumf %42, %43 : vector<1x128xf32>
      %c0_31 = arith.constant 0 : index
      %c0_32 = arith.constant 0 : index
      %45 = vector.load %arg7[%c0_31, %c0_32] : memref<128x128xf32, #tpu.memory_space<vmem>>, vector<128x128xf32>
      %cst_33 = arith.constant dense<0.000000e+00> : vector<1x128xf32>
      %46 = tpu.matmul %44, %45, %cst_33 {dimension_numbers = #tpu.dot_dimension_numbers<[1], [0], [0], [1], [0, 0, 1, 1], [], []>} : vector<1x128xf32>, vector<128x128xf32>, vector<1x128xf32> -> vector<1x128xf32>
      %c0_34 = arith.constant 0 : index
      %c0_35 = arith.constant 0 : index
      %47 = vector.load %arg8[%c0_34, %c0_35] : memref<1x128xf32, #tpu.memory_space<vmem>>, vector<1x128xf32>
      %48 = arith.addf %46, %47 : vector<1x128xf32>
      %c0_36 = arith.constant 0 : index
      %c0_37 = arith.constant 0 : index
      %49 = vector.load %arg9[%c0_36, %c0_37] : memref<1x128xf32, #tpu.memory_space<vmem>>, vector<1x128xf32>
      tpu.vector_store %arg9[%c0_36, %c0_37], %48 {strides = array<i32>} : memref<1x128xf32, #tpu.memory_space<vmem>>, vector<1x128xf32>,
    } else {
    }
    return
  }
  func.func @transform_0(%arg0: i32, %arg1: memref<2xi32, #tpu.memory_space<smem>>) -> (i32, i32) {
    %c0_i32 = arith.constant 0 : i32
    %c0_i32_0 = arith.constant 0 : i32
    return %arg0, %c0_i32 : i32, i32
  }
  func.func @transform_1(%arg0: i32, %arg1: memref<2xi32, #tpu.memory_space<smem>>) -> (i32, i32, i32) {
    %c0_i32 = arith.constant 0 : i32
    %c0_i32_0 = arith.constant 0 : i32
    %c0_i32_1 = arith.constant 0 : i32
    %c0_i32_2 = arith.constant 0 : i32
    return %c0_i32, %c0_i32_0, %c0_i32_1 : i32, i32, i32
  }
  func.func @transform_2(%arg0: i32, %arg1: memref<2xi32, #tpu.memory_space<smem>>) -> (i32, i32) {
    %c0_i32 = arith.constant 0 : i32
    %c0_i32_0 = arith.constant 0 : i32
    %c0_i32_1 = arith.constant 0 : i32
    return %c0_i32, %c0_i32_0 : i32, i32
  }
  func.func @transform_3(%arg0: i32, %arg1: memref<2xi32, #tpu.memory_space<smem>>) -> (i32, i32) {
    %c0_i32 = arith.constant 0 : i32
    %c0_i32_0 = arith.constant 0 : i32
    %c0_i32_1 = arith.constant 0 : i32
    return %c0_i32, %c0_i32_0 : i32, i32
  }
  func.func @transform_4(%arg0: i32, %arg1: memref<2xi32, #tpu.memory_space<smem>>) -> (i32, i32) {
    %c0_i32 = arith.constant 0 : i32
    %c0_i32_0 = arith.constant 0 : i32
    %c0_i32_1 = arith.constant 0 : i32
    return %c0_i32, %c0_i32_0 : i32, i32
  }
  func.func @transform_5(%arg0: i32, %arg1: memref<2xi32, #tpu.memory_space<smem>>) -> (i32, i32) {
    %c0_i32 = arith.constant 0 : i32
    %c0_i32_0 = arith.constant 0 : i32
    %c0_i32_1 = arith.constant 0 : i32
    return %c0_i32, %c0_i32_0 : i32, i32
  }
  func.func @transform_6(%arg0: i32, %arg1: memref<2xi32, #tpu.memory_space<smem>>) -> (i32, i32) {
    %c0_i32 = arith.constant 0 : i32
    %c0_i32_0 = arith.constant 0 : i32
    %c0_i32_1 = arith.constant 0 : i32
    return %c0_i32, %c0_i32_0 : i32, i32
  }
  func.func @transform_7(%arg0: i32, %arg1: memref<2xi32, #tpu.memory_space<smem>>) -> (i32, i32) {
    %c0_i32 = arith.constant 0 : i32
    %c0_i32_0 = arith.constant 0 : i32
    %c0_i32_1 = arith.constant 0 : i32
    return %c0_i32, %c0_i32_0 : i32, i32
  }
}

</mosaic_0001>

<llo_original>
// kernel: tpu_custom_call.1
$region0: #{tpu_custom_call.1}
  #allocation0 [shape = 'u32[]', space=smem, size = 0x4, offset = 0x4, fixed_abs, tag = 'smem constant byte address 0x4 - core index']
  #allocation1 [shape = 'u32[72,128]{1,0:T(1,128)}', space=vmem, size = 0x9000, scoped, tag = 'internal scratch']
  #allocation2 [shape = 'f32[2,8,128]{2,1,0:T(8,128)}', space=vmem, size = 0x2000, scoped, tag = 'scratch operand']
  #allocation3 [shape = 's32[1]{0}', space=sflag, size = 0x4, scoped, tag = 'scoped memory for tpu_custom_call.1']
  #allocation4 [shape = 'u8[512]{0}', space=smem, size = 0x200, scoped, tag = 'prefetched SMEM operand 0']
  %s0 = inlined_call_operand.hbm [shape: s32[2], index: 0, kind: input, shape index: {}]
  %s1 = inlined_call_operand.hbm [shape: bf16[16,128], index: 1, kind: input, shape index: {}]
  %s2 = inlined_call_operand.hbm [shape: f32[2,128,128], index: 2, kind: input, shape index: {}]
  %s3 = inlined_call_operand.vmem [shape: f32[1,128], index: 3, kind: input, shape index: {}]
  %s4 = inlined_call_operand.hbm [shape: f32[128,128], index: 4, kind: input, shape index: {}]
  %s5 = inlined_call_operand.vmem [shape: f32[1,128], index: 5, kind: input, shape index: {}]
  %s6 = inlined_call_operand.hbm [shape: f32[128,128], index: 6, kind: input, shape index: {}]
  %s7 = inlined_call_operand.vmem [shape: f32[1,128], index: 7, kind: input, shape index: {}]
  %s8 = inlined_call_operand.hbm [shape: f32[1,128], index: 8, kind: output, shape index: {}]
  %s9 = sld [smem:[#allocation0]]
  $region85: #{tpu_custom_call.1} parent=0
    _
  %s11 = ssub.s32 1, %s9
  %s12 = scalar_select 0, %s11, %s9
  %s14 = sshll.u32 %s0, 4
  %s15 = int_to_ptr.hbm [resolvable:$true] %s14
  %17 = dma.hbm_to_smem %s15, 16, [#allocation4], [#allocation3]
  %19 = dma.done [#allocation3], 16
  %20 = sfence
  $region1: #{tpu_custom_call.1} parent=0
    #allocation5 [shape = 'u8[4096]{0}', space=vmem, size = 0x1000, scoped, tag = 'input window, operand 1']
    #allocation6 [shape = 's32[2]{0}', space=sflag, size = 0x8, scoped, tag = 'scoped memory for tpu_custom_call.1']
    #allocation7 [shape = 's32[2]{0}', space=sflag, size = 0x8, scoped, tag = 'scoped memory for tpu_custom_call.1']
    #allocation8 [shape = 'u8[131072]{0}', space=vmem, size = 0x20000, scoped, tag = 'input window, operand 2, single buffered']
    #allocation9 [shape = 's32[1]{0}', space=sflag, size = 0x4, scoped, tag = 'scoped memory for tpu_custom_call.1']
    #allocation10 [shape = 'u8[65536]{0}', space=vmem, size = 0x10000, scoped, tag = 'input window, operand 4, single buffered']
    #allocation11 [shape = 'u8[65536]{0}', space=vmem, size = 0x10000, scoped, tag = 'input window, operand 6, single buffered']
    #allocation12 [shape = 's32[1]{0}', space=sflag, size = 0x4, scoped, tag = 'scoped memory for tpu_custom_call.1']
    #allocation13 [shape = 'u8[512]{0}', space=vmem, size = 0x400, scoped, tag = 'output window, operand 0, single buffered']
    %21 = vsyncpa [#allocation6], 0
    %s22 = scalar_lea.sflag [#allocation6], 1
    %23 = vsyncpa %s22, 0
    %24 = vsyncpa [#allocation9], 0
    %25 = vsyncpa [#allocation12], 0
    %26 = vsyncpa [#allocation7], 0
    loop: start=0, step=1, limit=4
    $region2: #{tpu_custom_call.1} parent=1 // loop_pre_header
      _
    $region3: #{tpu_custom_call.1} parent=1 // loop_header
      %s28 = sphi 0, %s32
      %p29 = scmp.ge.s32.totalorder %s28, 4
      %s38 = sphi 0, %s40
      %s41 = sphi 0, %s38
      %s42 = sphi 0, %s41
      %s58 = sphi 0, %s42
      %s62 = sphi 0, %s62
      %s64 = sphi 0, %s62
      %s65 = sphi 0, %s64
      %s79 = sphi 0, %s65
      %s83 = sphi 0, %s83
      %s85 = sphi 0, %s83
      %s86 = sphi 0, %s85
      %s100 = sphi 0, %s86
      %s104 = sphi 0, %s104
      %s106 = sphi 0, %s104
      %s107 = sphi 0, %s106
      %s121 = sphi 0, %s107
      %s125 = sphi 0, %s125
      %s127 = sphi 0, %s125
      %s128 = sphi 0, %s127
      %s142 = sphi 0, %s128
      %s146 = sphi 0, %s146
      %s148 = sphi 0, %s146
      %s149 = sphi 0, %s148
      %s163 = sphi 0, %s149
      %s167 = sphi 0, %s167
      %s169 = sphi 0, %s167
      %s170 = sphi 0, %s169
      %s184 = sphi 0, %s170
      %s188 = sphi 0, %s188
      %s190 = sphi 0, %s188
      %s191 = sphi 0, %s190
      %s205 = sphi 0, %s191
    $region4: #{tpu_custom_call.1} parent=1 // loop_header_branch
      %31 = sbr.rel (%p29) target = $region8
    $region5: #{tpu_custom_call.1} parent=1 // loop_body
      %s33 = ssub.s32 %s28, 1
      %s34 = ssub.s32 %s28, 2
      %s35 = sadd.s32 %s28, 1
      %s36 = ssub.s32 %s28, %s35
      %p37 = scmp.eq.s32.totalorder %s36, 0
      %s39 = sadd.s32 %s38, 1
      %s40 = scalar_select %p37, %s38, %s39
      %p43 = pneg %p37
      %p44 = scmp.eq.s32.totalorder %s28, 1
      %p45 = por %p43, %p44
      %p46 = scmp.ne.s32.totalorder %s38, %s41
      %p47 = scmp.eq.s32.totalorder %s28, 0
      %p48 = por %p46, %p47
      %p49 = scmp.ne.s32.totalorder %s38, %s41
      %p50 = scmp.eq.s32.totalorder %s33, 1
      %p51 = por %p49, %p50
      %p52 = scmp.ne.s32.totalorder %s41, %s42
      %p53 = scmp.eq.s32.totalorder %s33, 0
      %p54 = por %p52, %p53
      %p55 = scmp.ne.s32.totalorder %s41, %s42
      %p56 = scmp.eq.s32.totalorder %s34, 1
      %p57 = por %p55, %p56
      %p59 = scmp.ne.s32.totalorder %s42, %s58
      %p60 = scmp.eq.s32.totalorder %s34, 0
      %p61 = por %p59, %p60
      %s63 = sadd.s32 %s62, 1
      %p66 = scmp.eq.s32.totalorder %s28, 1
      %p67 = scmp.ne.s32.totalorder %s62, %s64
      %p68 = scmp.eq.s32.totalorder %s28, 0
      %p69 = por %p67, %p68
      %p70 = scmp.ne.s32.totalorder %s62, %s64
      %p71 = scmp.eq.s32.totalorder %s33, 1
      %p72 = por %p70, %p71
      %p73 = scmp.ne.s32.totalorder %s64, %s65
      %p74 = scmp.eq.s32.totalorder %s33, 0
      %p75 = por %p73, %p74
      %p76 = scmp.ne.s32.totalorder %s64, %s65
      %p77 = scmp.eq.s32.totalorder %s34, 1
      %p78 = por %p76, %p77
      %p80 = scmp.ne.s32.totalorder %s65, %s79
      %p81 = scmp.eq.s32.totalorder %s34, 0
      %p82 = por %p80, %p81
      %s84 = sadd.s32 %s83, 1
      %p87 = scmp.eq.s32.totalorder %s28, 1
      %p88 = scmp.ne.s32.totalorder %s83, %s85
      %p89 = scmp.eq.s32.totalorder %s28, 0
      %p90 = por %p88, %p89
      %p91 = scmp.ne.s32.totalorder %s83, %s85
      %p92 = scmp.eq.s32.totalorder %s33, 1
      %p93 = por %p91, %p92
      %p94 = scmp.ne.s32.totalorder %s85, %s86
      %p95 = scmp.eq.s32.totalorder %s33, 0
      %p96 = por %p94, %p95
      %p97 = scmp.ne.s32.totalorder %s85, %s86
      %p98 = scmp.eq.s32.totalorder %s34, 1
      %p99 = por %p97, %p98
      %p101 = scmp.ne.s32.totalorder %s86, %s100
      %p102 = scmp.eq.s32.totalorder %s34, 0
      %p103 = por %p101, %p102
      %s105 = sadd.s32 %s104, 1
      %p108 = scmp.eq.s32.totalorder %s28, 1
      %p109 = scmp.ne.s32.totalorder %s104, %s106
      %p110 = scmp.eq.s32.totalorder %s28, 0
      %p111 = por %p109, %p110
      %p112 = scmp.ne.s32.totalorder %s104, %s106
      %p113 = scmp.eq.s32.totalorder %s33, 1
      %p114 = por %p112, %p113
      %p115 = scmp.ne.s32.totalorder %s106, %s107
      %p116 = scmp.eq.s32.totalorder %s33, 0
      %p117 = por %p115, %p116
      %p118 = scmp.ne.s32.totalorder %s106, %s107
      %p119 = scmp.eq.s32.totalorder %s34, 1
      %p120 = por %p118, %p119
      %p122 = scmp.ne.s32.totalorder %s107, %s121
      %p123 = scmp.eq.s32.totalorder %s34, 0
      %p124 = por %p122, %p123
      %s126 = sadd.s32 %s125, 1
      %p129 = scmp.eq.s32.totalorder %s28, 1
      %p130 = scmp.ne.s32.totalorder %s125, %s127
      %p131 = scmp.eq.s32.totalorder %s28, 0
      %p132 = por %p130, %p131
      %p133 = scmp.ne.s32.totalorder %s125, %s127
      %p134 = scmp.eq.s32.totalorder %s33, 1
      %p135 = por %p133, %p134
      %p136 = scmp.ne.s32.totalorder %s127, %s128
      %p137 = scmp.eq.s32.totalorder %s33, 0
      %p138 = por %p136, %p137
      %p139 = scmp.ne.s32.totalorder %s127, %s128
      %p140 = scmp.eq.s32.totalorder %s34, 1
      %p141 = por %p139, %p140
      %p143 = scmp.ne.s32.totalorder %s128, %s142
      %p144 = scmp.eq.s32.totalorder %s34, 0
      %p145 = por %p143, %p144
      %s147 = sadd.s32 %s146, 1
      %p150 = scmp.eq.s32.totalorder %s28, 1
      %p151 = scmp.ne.s32.totalorder %s146, %s148
      %p152 = scmp.eq.s32.totalorder %s28, 0
      %p153 = por %p151, %p152
      %p154 = scmp.ne.s32.totalorder %s146, %s148
      %p155 = scmp.eq.s32.totalorder %s33, 1
      %p156 = por %p154, %p155
      %p157 = scmp.ne.s32.totalorder %s148, %s149
      %p158 = scmp.eq.s32.totalorder %s33, 0
      %p159 = por %p157, %p158
      %p160 = scmp.ne.s32.totalorder %s148, %s149
      %p161 = scmp.eq.s32.totalorder %s34, 1
      %p162 = por %p160, %p161
      %p164 = scmp.ne.s32.totalorder %s149, %s163
      %p165 = scmp.eq.s32.totalorder %s34, 0
      %p166 = por %p164, %p165
      %s168 = sadd.s32 %s167, 1
      %p171 = scmp.eq.s32.totalorder %s28, 1
      %p172 = scmp.ne.s32.totalorder %s167, %s169
      %p173 = scmp.eq.s32.totalorder %s28, 0
      %p174 = por %p172, %p173
      %p175 = scmp.ne.s32.totalorder %s167, %s169
      %p176 = scmp.eq.s32.totalorder %s33, 1
      %p177 = por %p175, %p176
      %p178 = scmp.ne.s32.totalorder %s169, %s170
      %p179 = scmp.eq.s32.totalorder %s33, 0
      %p180 = por %p178, %p179
      %p181 = scmp.ne.s32.totalorder %s169, %s170
      %p182 = scmp.eq.s32.totalorder %s34, 1
      %p183 = por %p181, %p182
      %p185 = scmp.ne.s32.totalorder %s170, %s184
      %p186 = scmp.eq.s32.totalorder %s34, 0
      %p187 = por %p185, %p186
      %s189 = sadd.s32 %s188, 1
      %p192 = scmp.eq.s32.totalorder %s28, 1
      %p193 = scmp.ne.s32.totalorder %s188, %s190
      %p194 = scmp.eq.s32.totalorder %s28, 0
      %p195 = por %p193, %p194
      %p196 = scmp.ne.s32.totalorder %s188, %s190
      %p197 = scmp.eq.s32.totalorder %s33, 1
      %p198 = por %p196, %p197
      %p199 = scmp.ne.s32.totalorder %s190, %s191
      %p200 = scmp.eq.s32.totalorder %s33, 0
      %p201 = por %p199, %p200
      %p202 = scmp.ne.s32.totalorder %s190, %s191
      %p203 = scmp.eq.s32.totalorder %s34, 1
      %p204 = por %p202, %p203
      %p206 = scmp.ne.s32.totalorder %s191, %s205
      %p207 = scmp.eq.s32.totalorder %s34, 0
      %p208 = por %p206, %p207
      %p209 = scmp.le.s32.totalorder 1, %s28
      %p210 = scmp.lt.s32.totalorder %s28, 3
      %p211 = pnand %p209, %p210
      %p212 = pneg %p211
      // Predicated region
      $region9: #{tpu_custom_call.1} parent=5 // pred_check
        _
      $region10: #{tpu_custom_call.1} parent=5 // pred_check_branch
        %214 = sbr.rel (%p211) target = $region12
      $region11: #{tpu_custom_call.1} parent=5 // pred_region
        %s215 = ssub.s32 %s28, 1
        // Predicated region
        $region13: #{tpu_custom_call.1} parent=11 // pred_check
          %p216 = pneg %p75
        $region14: #{tpu_custom_call.1} parent=11 // pred_check_branch
          %218 = sbr.rel (%p216) target = $region16
        $region15: #{tpu_custom_call.1} parent=11 // pred_region
          %220 = vsyncadd [#allocation9], 0
          %s221 = sshll.u32 %s2, 4
          %s222 = int_to_ptr.hbm [resolvable:$true] %s221
          %s223 = sshll.u32 [#allocation8], 4
          %s224 = int_to_ptr.vmem [resolvable:$true] %s223
          %229 = dma.hbm_to_vmem [thread:$0]  %s222, 4096, %s224, [#allocation9], 128, 128, 8
        $region16: #{tpu_custom_call.1} parent=11 // pred_fallthru
          _
        // Predicated region
        $region17: #{tpu_custom_call.1} parent=11 // pred_check
          %p230 = pneg %p96
        $region18: #{tpu_custom_call.1} parent=11 // pred_check_branch
          %232 = sbr.rel (%p230) target = $region20
        $region19: #{tpu_custom_call.1} parent=11 // pred_region
          _
        $region20: #{tpu_custom_call.1} parent=11 // pred_fallthru
          _
        // Predicated region
        $region21: #{tpu_custom_call.1} parent=11 // pred_check
          %p233 = pneg %p117
        $region22: #{tpu_custom_call.1} parent=11 // pred_check_branch
          %235 = sbr.rel (%p233) target = $region24
        $region23: #{tpu_custom_call.1} parent=11 // pred_region
          %237 = vsyncadd [#allocation9], 0
          %s238 = sshll.u32 %s4, 4
          %s239 = int_to_ptr.hbm [resolvable:$true] %s238
          %s240 = sshll.u32 [#allocation10], 4
          %s241 = int_to_ptr.vmem [resolvable:$true] %s240
          %246 = dma.hbm_to_vmem [thread:$0]  %s239, 2048, %s241, [#allocation9], 128, 128, 8
        $region24: #{tpu_custom_call.1} parent=11 // pred_fallthru
          _
        // Predicated region
        $region25: #{tpu_custom_call.1} parent=11 // pred_check
          %p247 = pneg %p138
        $region26: #{tpu_custom_call.1} parent=11 // pred_check_branch
          %249 = sbr.rel (%p247) target = $region28
        $region27: #{tpu_custom_call.1} parent=11 // pred_region
          _
        $region28: #{tpu_custom_call.1} parent=11 // pred_fallthru
          _
        // Predicated region
        $region29: #{tpu_custom_call.1} parent=11 // pred_check
          %p250 = pneg %p159
        $region30: #{tpu_custom_call.1} parent=11 // pred_check_branch
          %252 = sbr.rel (%p250) target = $region32
        $region31: #{tpu_custom_call.1} parent=11 // pred_region
          %254 = vsyncadd [#allocation12], 0
          %s255 = sshll.u32 %s6, 4
          %s256 = int_to_ptr.hbm [resolvable:$true] %s255
          %s257 = sshll.u32 [#allocation11], 4
          %s258 = int_to_ptr.vmem [resolvable:$true] %s257
          %263 = dma.hbm_to_vmem [thread:$0]  %s256, 2048, %s258, [#allocation12], 128, 128, 8
        $region32: #{tpu_custom_call.1} parent=11 // pred_fallthru
          _
        // Predicated region
        $region33: #{tpu_custom_call.1} parent=11 // pred_check
          %p264 = pneg %p180
        $region34: #{tpu_custom_call.1} parent=11 // pred_check_branch
          %266 = sbr.rel (%p264) target = $region36
        $region35: #{tpu_custom_call.1} parent=11 // pred_region
          _
        $region36: #{tpu_custom_call.1} parent=11 // pred_fallthru
          _
      $region12: #{tpu_custom_call.1} parent=5 // pred_fallthru
        _
      %p267 = scmp.lt.s32.totalorder %s28, 2
      // Predicated region
      $region37: #{tpu_custom_call.1} parent=5 // pred_check
        %p268 = pneg %p267
      $region38: #{tpu_custom_call.1} parent=5 // pred_check_branch
        %270 = sbr.rel (%p268) target = $region40
      $region39: #{tpu_custom_call.1} parent=5 // pred_region
        // Predicated region
        $region41: #{tpu_custom_call.1} parent=39 // pred_check
          %p271 = pneg %p48
        $region42: #{tpu_custom_call.1} parent=39 // pred_check_branch
          %273 = sbr.rel (%p271) target = $region44
        $region43: #{tpu_custom_call.1} parent=39 // pred_region
          %s274 = sand.u32 %s38, 1
          %s275 = scalar_lea.sflag [#allocation6], %s274
          %s276 = sand.u32 %s38, 1
          %s277 = smul.addr %s276, 4
          %s278 = scalar_lea.vmem [#allocation5], %s277
          %280 = vsyncadd %s275, 0
          %s281 = smul.addr %s28, 4
          %s282 = scalar_lea.hbm %s1, %s281
          %s284 = sshll.u32 %s282, 4
          %s285 = int_to_ptr.hbm [resolvable:$true] %s284
          %s286 = sshll.u32 %s278, 4
          %s287 = int_to_ptr.vmem [resolvable:$true] %s286
          %289 = dma.hbm_to_vmem [thread:$0]  %s285, 64, %s287, %s275
        $region44: #{tpu_custom_call.1} parent=39 // pred_fallthru
          _
      $region40: #{tpu_custom_call.1} parent=5 // pred_fallthru
        _
      %p290 = scmp.le.s32.totalorder 1, %s28
      %p291 = scmp.lt.s32.totalorder %s28, 3
      %p292 = pnand %p290, %p291
      %p293 = pneg %p292
      // Predicated region
      $region45: #{tpu_custom_call.1} parent=5 // pred_check
        _
      $region46: #{tpu_custom_call.1} parent=5 // pred_check_branch
        %295 = sbr.rel (%p292) target = $region48
      $region47: #{tpu_custom_call.1} parent=5 // pred_region
        %s296 = ssub.s32 %s28, 1
        %s297 = sand.u32 %s41, 1
        %s298 = scalar_lea.sflag [#allocation6], %s297
        %s299 = sand.u32 %s41, 1
        %s300 = smul.addr %s299, 4
        %s301 = scalar_lea.vmem [#allocation5], %s300
        // Predicated region
        $region49: #{tpu_custom_call.1} parent=47 // pred_check
          %p302 = pneg %p54
        $region50: #{tpu_custom_call.1} parent=47 // pred_check_branch
          %304 = sbr.rel (%p302) target = $region52
        $region51: #{tpu_custom_call.1} parent=47 // pred_region
          %306 = dma.done %s298, 64
        $region52: #{tpu_custom_call.1} parent=47 // pred_fallthru
          _
        // Predicated region
        $region53: #{tpu_custom_call.1} parent=47 // pred_check
          %p307 = pneg %p75
        $region54: #{tpu_custom_call.1} parent=47 // pred_check_branch
          %309 = sbr.rel (%p307) target = $region56
        $region55: #{tpu_custom_call.1} parent=47 // pred_region
          %311 = dma.done [#allocation9], 4096
        $region56: #{tpu_custom_call.1} parent=47 // pred_fallthru
          _
        // Predicated region
        $region57: #{tpu_custom_call.1} parent=47 // pred_check
          %p312 = pneg %p117
        $region58: #{tpu_custom_call.1} parent=47 // pred_check_branch
          %314 = sbr.rel (%p312) target = $region60
        $region59: #{tpu_custom_call.1} parent=47 // pred_region
          %316 = dma.done [#allocation9], 2048
        $region60: #{tpu_custom_call.1} parent=47 // pred_fallthru
          _
        // Predicated region
        $region61: #{tpu_custom_call.1} parent=47 // pred_check
          %p317 = pneg %p159
        $region62: #{tpu_custom_call.1} parent=47 // pred_check_branch
          %319 = sbr.rel (%p317) target = $region64
        $region63: #{tpu_custom_call.1} parent=47 // pred_region
          %321 = dma.done [#allocation12], 2048
        $region64: #{tpu_custom_call.1} parent=47 // pred_fallthru
          _
        %s322 = sand.u32 %s41, 1
        %s323 = scalar_lea.sflag [#allocation6], %s322
        %s324 = sand.u32 %s41, 1
        %s325 = smul.addr %s324, 4
        %s326 = scalar_lea.vmem [#allocation5], %s325
        %p327 = pneg %p54
        %p328 = pneg %p51
        %p329 = pneg %p75
        %p330 = pneg %p72
        %p331 = pneg %p96
        %p332 = pneg %p93
        %p333 = pneg %p117
        %p334 = pneg %p114
        %p335 = pneg %p138
        %p336 = pneg %p135
        %p337 = pneg %p159
        %p338 = pneg %p156
        %p339 = pneg %p180
        %p340 = pneg %p177
        %p341 = pneg %p201
        %p342 = pneg %p198
        %p343 = scmp.eq.s32.totalorder %s33, 0
        // Predicated region
        $region65: #{tpu_custom_call.1} parent=47 // pred_check
          %p344 = pneg %p343
        $region66: #{tpu_custom_call.1} parent=47 // pred_check_branch
          %346 = sbr.rel (%p344) target = $region68
        $region67: #{tpu_custom_call.1} parent=47 // pred_region
          %347 = vst [vmem:[#allocation2] sm:$0xff] 0.0
          %348 = vst [vmem:[#allocation2 + $0x8] sm:$0xff] 0.0
        $region68: #{tpu_custom_call.1} parent=47 // pred_fallthru
          _
        %s349 = sld [smem:[#allocation4 + %s33]]
        %v350 = vld [vmem:[%s301] sm:$0xf]
        %v351 = vunpack.c.l.bf16 %v350
        %v352 = vadd.f32 %v351, 0.0
        %s353 = smul.u32 %s349, 8
        %s354 = scalar_lea.vmem [#allocation2], %s353
        %v355 = vld [vmem:[%s354] sm:$0xff]
        %v356 = vadd.f32 %v355, %v352
        %357 = vst [vmem:[%s354] sm:$0xff] %v356
        %p358 = scmp.eq.s32.totalorder %s33, 1
        // Predicated region
        $region69: #{tpu_custom_call.1} parent=47 // pred_check
          %p359 = pneg %p358
        $region70: #{tpu_custom_call.1} parent=47 // pred_check_branch
          %361 = sbr.rel (%p359) target = $region72
        $region71: #{tpu_custom_call.1} parent=47 // pred_region
          %v362 = vld [vmem:[%s3] sm:$0x1]
          %v363 = vld [vmem:[#allocation2] sm:$0xff]
          %v364 = vrot.slane %v363, 4
          %v365 = vadd.f32 %v363, %v364
          %v366 = vrot.slane %v365, 2
          %v367 = vadd.f32 %v365, %v366
          %v368 = vrot.slane %v367, 1
          %v369 = vadd.f32 %v367, %v368
          %v370 = vld [vmem:[#allocation8] sm:$0xff]
          %v371 = vld [vmem:[#allocation8 + $0x8] sm:$0xff]
          %v372 = vld [vmem:[#allocation8 + $0x10] sm:$0xff]
          %v373 = vld [vmem:[#allocation8 + $0x18] sm:$0xff]
          %v374 = vld [vmem:[#allocation8 + $0x20] sm:$0xff]
          %v375 = vld [vmem:[#allocation8 + $0x28] sm:$0xff]
          %v376 = vld [vmem:[#allocation8 + $0x30] sm:$0xff]
          %v377 = vld [vmem:[#allocation8 + $0x38] sm:$0xff]
          %v378 = vld [vmem:[#allocation8 + $0x40] sm:$0xff]
          %v379 = vld [vmem:[#allocation8 + $0x48] sm:$0xff]
          %v380 = vld [vmem:[#allocation8 + $0x50] sm:$0xff]
          %v381 = vld [vmem:[#allocation8 + $0x58] sm:$0xff]
          %v382 = vld [vmem:[#allocation8 + $0x60] sm:$0xff]
          %v383 = vld [vmem:[#allocation8 + $0x68] sm:$0xff]
          %v384 = vld [vmem:[#allocation8 + $0x70] sm:$0xff]
          %v385 = vld [vmem:[#allocation8 + $0x78] sm:$0xff]
          %386 = vmatpush.msra.mxu0 %v385
          %387 = vmatpush.msra.mxu0 %v384
          %388 = vmatpush.msra.mxu0 %v383
          %389 = vmatpush.msra.mxu0 %v382
          %390 = vmatpush.msra.mxu0 %v381
          %391 = vmatpush.msra.mxu0 %v380
          %392 = vmatpush.msra.mxu0 %v379
          %393 = vmatpush.msra.mxu0 %v378
          %394 = vmatpush.msra.mxu0 %v377
          %395 = vmatpush.msra.mxu0 %v376
          %396 = vmatpush.msra.mxu0 %v375
          %397 = vmatpush.msra.mxu0 %v374
          %398 = vmatpush.msra.mxu0 %v373
          %399 = vmatpush.msra.mxu0 %v372
          %400 = vmatpush.msra.mxu0 %v371
          %401 = vmatpush.msra.mxu0 %v370
          %402 = vmatmul.f32.gmra.mxu0 %v369
          %v403 = vpop.f32.mrf.mxu0
          %v404 = vadd.f32 0.0, %v403
          %405 = vdwg.mxu0
          %v406 = vadd.f32 %v362, %v404
          %s407 = scalar_lea.vmem [#allocation2], 8
          %v408 = vld [vmem:[%s407] sm:$0xff]
          %v409 = vrot.slane %v408, 4
          %v410 = vadd.f32 %v408, %v409
          %v411 = vrot.slane %v410, 2
          %v412 = vadd.f32 %v410, %v411
          %v413 = vrot.slane %v412, 1
          %v414 = vadd.f32 %v412, %v413
          %s415 = scalar_lea.vmem [#allocation8], 128
          %v416 = vld [vmem:[%s415] sm:$0xff]
          %v417 = vld [vmem:[%s415 + $0x8] sm:$0xff]
          %v418 = vld [vmem:[%s415 + $0x10] sm:$0xff]
          %v419 = vld [vmem:[%s415 + $0x18] sm:$0xff]
          %v420 = vld [vmem:[%s415 + $0x20] sm:$0xff]
          %v421 = vld [vmem:[%s415 + $0x28] sm:$0xff]
          %v422 = vld [vmem:[%s415 + $0x30] sm:$0xff]
          %v423 = vld [vmem:[%s415 + $0x38] sm:$0xff]
          %v424 = vld [vmem:[%s415 + $0x40] sm:$0xff]
          %v425 = vld [vmem:[%s415 + $0x48] sm:$0xff]
          %v426 = vld [vmem:[%s415 + $0x50] sm:$0xff]
          %v427 = vld [vmem:[%s415 + $0x58] sm:$0xff]
          %v428 = vld [vmem:[%s415 + $0x60] sm:$0xff]
          %v429 = vld [vmem:[%s415 + $0x68] sm:$0xff]
          %v430 = vld [vmem:[%s415 + $0x70] sm:$0xff]
          %v431 = vld [vmem:[%s415 + $0x78] sm:$0xff]
          %432 = vmatpush.msra.mxu0 %v431
          %433 = vmatpush.msra.mxu0 %v430
          %434 = vmatpush.msra.mxu0 %v429
          %435 = vmatpush.msra.mxu0 %v428
          %436 = vmatpush.msra.mxu0 %v427
          %437 = vmatpush.msra.mxu0 %v426
          %438 = vmatpush.msra.mxu0 %v425
          %439 = vmatpush.msra.mxu0 %v424
          %440 = vmatpush.msra.mxu0 %v423
          %441 = vmatpush.msra.mxu0 %v422
          %442 = vmatpush.msra.mxu0 %v421
          %443 = vmatpush.msra.mxu0 %v420
          %444 = vmatpush.msra.mxu0 %v419
          %445 = vmatpush.msra.mxu0 %v418
          %446 = vmatpush.msra.mxu0 %v417
          %447 = vmatpush.msra.mxu0 %v416
          %448 = vmatmul.f32.gmra.mxu0 %v414
          %v449 = vpop.f32.mrf.mxu0
          %v450 = vadd.f32 0.0, %v449
          %451 = vdwg.mxu0
          %v452 = vadd.f32 %v406, %v450
          %v453 = vmul.f32 %v452, 0.01923077
          %v454 = vld [vmem:[#allocation10] sm:$0xff]
          %v455 = vld [vmem:[#allocation10 + $0x8] sm:$0xff]
          %v456 = vld [vmem:[#allocation10 + $0x10] sm:$0xff]
          %v457 = vld [vmem:[#allocation10 + $0x18] sm:$0xff]
          %v458 = vld [vmem:[#allocation10 + $0x20] sm:$0xff]
          %v459 = vld [vmem:[#allocation10 + $0x28] sm:$0xff]
          %v460 = vld [vmem:[#allocation10 + $0x30] sm:$0xff]
          %v461 = vld [vmem:[#allocation10 + $0x38] sm:$0xff]
          %v462 = vld [vmem:[#allocation10 + $0x40] sm:$0xff]
          %v463 = vld [vmem:[#allocation10 + $0x48] sm:$0xff]
          %v464 = vld [vmem:[#allocation10 + $0x50] sm:$0xff]
          %v465 = vld [vmem:[#allocation10 + $0x58] sm:$0xff]
          %v466 = vld [vmem:[#allocation10 + $0x60] sm:$0xff]
          %v467 = vld [vmem:[#allocation10 + $0x68] sm:$0xff]
          %v468 = vld [vmem:[#allocation10 + $0x70] sm:$0xff]
          %v469 = vld [vmem:[#allocation10 + $0x78] sm:$0xff]
          %v470 = vld [vmem:[%s5] sm:$0x1]
          %471 = vmatpush.msra.mxu0 %v469
          %472 = vmatpush.msra.mxu0 %v468
          %473 = vmatpush.msra.mxu0 %v467
          %474 = vmatpush.msra.mxu0 %v466
          %475 = vmatpush.msra.mxu0 %v465
          %476 = vmatpush.msra.mxu0 %v464
          %477 = vmatpush.msra.mxu0 %v463
          %478 = vmatpush.msra.mxu0 %v462
          %479 = vmatpush.msra.mxu0 %v461
          %480 = vmatpush.msra.mxu0 %v460
          %481 = vmatpush.msra.mxu0 %v459
          %482 = vmatpush.msra.mxu0 %v458
          %483 = vmatpush.msra.mxu0 %v457
          %484 = vmatpush.msra.mxu0 %v456
          %485 = vmatpush.msra.mxu0 %v455
          %486 = vmatpush.msra.mxu0 %v454
          %487 = vmatmul.f32.gmra.mxu0 %v453
          %v488 = vpop.f32.mrf.mxu0
          %v489 = vadd.f32 %v470, %v488
          %490 = vdwg.mxu0
          %v491 = vmax.f32 %v489, 0.0
          %v492 = vld [vmem:[#allocation11] sm:$0xff]
          %v493 = vld [vmem:[#allocation11 + $0x8] sm:$0xff]
          %v494 = vld [vmem:[#allocation11 + $0x10] sm:$0xff]
          %v495 = vld [vmem:[#allocation11 + $0x18] sm:$0xff]
          %v496 = vld [vmem:[#allocation11 + $0x20] sm:$0xff]
          %v497 = vld [vmem:[#allocation11 + $0x28] sm:$0xff]
          %v498 = vld [vmem:[#allocation11 + $0x30] sm:$0xff]
          %v499 = vld [vmem:[#allocation11 + $0x38] sm:$0xff]
          %v500 = vld [vmem:[#allocation11 + $0x40] sm:$0xff]
          %v501 = vld [vmem:[#allocation11 + $0x48] sm:$0xff]
          %v502 = vld [vmem:[#allocation11 + $0x50] sm:$0xff]
          %v503 = vld [vmem:[#allocation11 + $0x58] sm:$0xff]
          %v504 = vld [vmem:[#allocation11 + $0x60] sm:$0xff]
          %v505 = vld [vmem:[#allocation11 + $0x68] sm:$0xff]
          %v506 = vld [vmem:[#allocation11 + $0x70] sm:$0xff]
          %v507 = vld [vmem:[#allocation11 + $0x78] sm:$0xff]
          %v508 = vld [vmem:[%s7] sm:$0x1]
          %509 = vmatpush.msra.mxu0 %v507
          %510 = vmatpush.msra.mxu0 %v506
          %511 = vmatpush.msra.mxu0 %v505
          %512 = vmatpush.msra.mxu0 %v504
          %513 = vmatpush.msra.mxu0 %v503
          %514 = vmatpush.msra.mxu0 %v502
          %515 = vmatpush.msra.mxu0 %v501
          %516 = vmatpush.msra.mxu0 %v500
          %517 = vmatpush.msra.mxu0 %v499
          %518 = vmatpush.msra.mxu0 %v498
          %519 = vmatpush.msra.mxu0 %v497
          %520 = vmatpush.msra.mxu0 %v496
          %521 = vmatpush.msra.mxu0 %v495
          %522 = vmatpush.msra.mxu0 %v494
          %523 = vmatpush.msra.mxu0 %v493
          %524 = vmatpush.msra.mxu0 %v492
          %525 = vmatmul.f32.gmra.mxu0 %v491
          %v526 = vpop.f32.mrf.mxu0
          %v527 = vadd.f32 %v508, %v526
          %528 = vdwg.mxu0
          %529 = vst [vmem:[#allocation13] sm:$0x1] %v527
        $region72: #{tpu_custom_call.1} parent=47 // pred_fallthru
          _
        // Predicated region
        $region73: #{tpu_custom_call.1} parent=47 // pred_check
          %p530 = pneg %p198
        $region74: #{tpu_custom_call.1} parent=47 // pred_check_branch
          %532 = sbr.rel (%p530) target = $region76
        $region75: #{tpu_custom_call.1} parent=47 // pred_region
          %534 = vsyncadd [#allocation7], 0
          %s536 = sshll.u32 [#allocation13], 4
          %s537 = int_to_ptr.vmem [resolvable:$true] %s536
          %s538 = sshll.u32 %s8, 4
          %s539 = int_to_ptr.hbm [resolvable:$true] %s538
          %541 = dma.vmem_to_hbm [thread:$0]  %s537, 16, %s539, [#allocation7]
        $region76: #{tpu_custom_call.1} parent=47 // pred_fallthru
          _
        // Predicated region
        $region77: #{tpu_custom_call.1} parent=47 // pred_check
          %p542 = pneg %p198
        $region78: #{tpu_custom_call.1} parent=47 // pred_check_branch
          %544 = sbr.rel (%p542) target = $region80
        $region79: #{tpu_custom_call.1} parent=47 // pred_region
          %546 = dma.done [#allocation7], 16
        $region80: #{tpu_custom_call.1} parent=47 // pred_fallthru
          _
      $region48: #{tpu_custom_call.1} parent=5 // pred_fallthru
        _
      %p547 = scmp.le.s32.totalorder 2, %s28
      // Predicated region
      $region81: #{tpu_custom_call.1} parent=5 // pred_check
        %p548 = pneg %p547
      $region82: #{tpu_custom_call.1} parent=5 // pred_check_branch
        %550 = sbr.rel (%p548) target = $region84
      $region83: #{tpu_custom_call.1} parent=5 // pred_region
        %s551 = ssub.s32 %s28, 2
      $region84: #{tpu_custom_call.1} parent=5 // pred_fallthru
        _
    $region6: #{tpu_custom_call.1} parent=1 // loop_footer
      %s32 = sadd.s32 1, %s28
    $region7: #{tpu_custom_call.1} parent=1 // loop_footer_branch
      %27 = sbr.rel target = $region3
    $region8: #{tpu_custom_call.1} parent=1 // loop_exit
      _
    %552 = vsyncpa [#allocation6], 1
    %s553 = scalar_lea.sflag [#allocation6], 1
    %554 = vsyncpa %s553, 1
    %555 = vsyncpa [#allocation9], 1
    %556 = vsyncpa [#allocation12], 1
    %557 = vsyncpa [#allocation7], 1
    %s558 = scalar_lea.sflag [#allocation7], 1
    %559 = vsyncpa %s558, 1

</llo_original>
